<compile_context>
chip_gen: v6e
topology: v6e:2x2x1
jax: 0.10.0
libtpu: 0.0.40
codegen_flags: <defaults>
</compile_context>

<pallas_src>
import functools

import jax
import jax.numpy as jnp
from jax.experimental import pallas as pl
from jax.experimental.pallas import tpu as pltpu

_BN_EPS = 1e-5


def _round_up(x, m):
    return (x + m - 1) // m * m


def _feature_trans_kernel(x_ref, w1_ref, w2_ref, bias_ref, o_ref):
    # conv1 (+ folded BN): (TILE_N, Cin_p) @ (Cin_p, Cout_p), f32 accumulation.
    h = jnp.dot(x_ref[...], w1_ref[...], preferred_element_type=jnp.float32)
    b = bias_ref[...]                       # (8, Cout_p) f32: row0=b_eff, row1=b2
    h = h + b[0:1, :]
    h = jnp.maximum(h, 0.0)                 # ReLU (f32 epilogue)
    # conv2: cast back to the MXU compute dtype, accumulate in f32.
    y = jnp.dot(h.astype(w2_ref.dtype), w2_ref[...],
                preferred_element_type=jnp.float32)
    y = y + b[1:2, :]
    o_ref[...] = y.astype(o_ref.dtype)


def feature_trans_two_layer(x, params, *, tile_n=512,
                            compute_dtype=jnp.bfloat16):
    """x: (N, C_in) float32.  Returns (N, C_out) float32."""
    n, c_in = x.shape
    c_out = params["w1"].shape[0]

    # ---- Constant folding in the wrapper (amortized over all N) ----
    # BN(eval): (h - mean) * gamma / sqrt(var+eps) + beta, folded into conv1.
    scale = params["gamma"] * jax.lax.rsqrt(params["running_var"] + _BN_EPS)
    w1_eff = params["w1"].T * scale[None, :]                        # (Cin, Cout)
    b_eff = (params["b1"] - params["running_mean"]) * scale + params["beta"]
    w2t = params["w2"].T                                            # (Cout, Cout)
    b2 = params["b2"]

    # ---- Padding to lane/sublane-friendly shapes ----
    c_in_p = _round_up(c_in, 128)
    c_out_p = _round_up(c_out, 128)
    tile_n = _round_up(max(16, min(tile_n, _round_up(n, 16))), 16)
    n_p = _round_up(n, tile_n)

    x_p = jnp.zeros((n_p, c_in_p), compute_dtype)
    x_p = x_p.at[:n, :c_in].set(x.astype(compute_dtype))
    w1_p = jnp.zeros((c_in_p, c_out_p), compute_dtype)
    w1_p = w1_p.at[:c_in, :c_out].set(w1_eff.astype(compute_dtype))
    w2_p = jnp.zeros((c_out_p, c_out_p), compute_dtype)
    w2_p = w2_p.at[:c_out, :c_out].set(w2t.astype(compute_dtype))
    biases = jnp.zeros((8, c_out_p), jnp.float32)
    biases = biases.at[0, :c_out].set(b_eff)
    biases = biases.at[1, :c_out].set(b2)

    grid = (n_p // tile_n,)
    out = pl.pallas_call(
        _feature_trans_kernel,
        out_shape=jax.ShapeDtypeStruct((n_p, c_out_p), jnp.float32),
        grid_spec=pltpu.PrefetchScalarGridSpec(
            num_scalar_prefetch=0,
            grid=grid,
            in_specs=[
                pl.BlockSpec((tile_n, c_in_p), lambda i: (i, 0)),     # x tile
                pl.BlockSpec((c_in_p, c_out_p), lambda i: (0, 0)),    # w1 (resident)
                pl.BlockSpec((c_out_p, c_out_p), lambda i: (0, 0)),   # w2 (resident)
                pl.BlockSpec((8, c_out_p), lambda i: (0, 0)),         # stacked biases
            ],
            out_specs=pl.BlockSpec((tile_n, c_out_p), lambda i: (i, 0)),
        ),
        compiler_params=pltpu.CompilerParams(
            dimension_semantics=("parallel",)),
    )(x_p, w1_p, w2_p, biases)
    return out[:n, :c_out]


def init_params(key, input_dim, out_dim):
    """Deterministic synthetic parameters (no checkpoint loading)."""
    ks = jax.random.split(key, 8)
    return {
        # conv1 weight: (C_out, C_in, 1, 1) stored squeezed as (C_out, C_in)
        "w1": jax.random.normal(ks[0], (out_dim, input_dim), jnp.float32) * 0.05,
        "b1": jax.random.normal(ks[1], (out_dim,), jnp.float32) * 0.05,
        # BatchNorm2d parameters (eval-mode running stats)
        "gamma": 1.0 + 0.1 * jax.random.normal(ks[2], (out_dim,), jnp.float32),
        "beta": 0.1 * jax.random.normal(ks[3], (out_dim,), jnp.float32),
        "running_mean": 0.1 * jax.random.normal(ks[4], (out_dim,), jnp.float32),
        "running_var": jax.random.uniform(ks[5], (out_dim,), jnp.float32, 0.5, 1.5),
        # conv2 weight: (C_out, C_out, 1, 1) -> (C_out, C_out)
        "w2": jax.random.normal(ks[6], (out_dim, out_dim), jnp.float32) * 0.05,
        "b2": jax.random.normal(ks[7], (out_dim,), jnp.float32) * 0.05,
    }


def _reference(x, params):
    """Pure-JAX f32 reference of the PyTorch forward (eval-mode BN)."""
    h = x @ params["w1"].T + params["b1"]
    h = (h - params["running_mean"]) / jnp.sqrt(params["running_var"] + _BN_EPS)
    h = h * params["gamma"] + params["beta"]
    h = jnp.maximum(h, 0.0)
    return h @ params["w2"].T + params["b2"]


if __name__ == "__main__":
    # Small shapes consistent with the module: batch of feature vectors (N, C_in),
    # equivalent to PyTorch input (N, C_in, 1, 1) after the unsqueezes.
    N, INPUT_DIM, OUT_DIM = 8, 32, 64

    key = jax.random.PRNGKey(0)
    kx, kp = jax.random.split(key)
    x = jax.random.normal(kx, (N, INPUT_DIM), jnp.float32)
    params = init_params(kp, INPUT_DIM, OUT_DIM)

    ref = _reference(x, params)

    # 1) f32 compute path: tight check of kernel logic (BN fold, padding, tiling).
    out_f32 = jax.block_until_ready(
        feature_trans_two_layer(x, params, compute_dtype=jnp.float32))
    assert out_f32.shape == (N, OUT_DIM)
    assert jnp.allclose(out_f32, ref, atol=1e-4, rtol=1e-4), "f32 mismatch vs reference"

    # 2) bf16 MXU path (perf configuration): looser tolerance for bf16 operands.
    out_bf16 = jax.block_until_ready(
        feature_trans_two_layer(x, params, compute_dtype=jnp.bfloat16))
    assert out_bf16.shape == (N, OUT_DIM)
    assert jnp.allclose(out_bf16, ref, atol=2e-2, rtol=2e-2), "bf16 mismatch vs reference"

    print("KERNEL_OK")
</pallas_src>

<mosaic_0001>
module attributes {stable_mosaic.version = 11 : i64} {
  func.func @_feature_trans_kernel(%arg0: i32, %arg1: memref<16x128xf32, #tpu.memory_space<vmem>>, %arg2: memref<128x128xf32, #tpu.memory_space<vmem>>, %arg3: memref<128x128xf32, #tpu.memory_space<vmem>>, %arg4: memref<8x128xf32, #tpu.memory_space<vmem>>, %arg5: memref<16x128xf32, #tpu.memory_space<vmem>>) attributes {dimension_semantics = [#tpu.dimension_semantics<parallel>], iteration_bounds = array<i64: 1>, scalar_prefetch = 0 : i64, scratch_operands = 0 : i64, tpu.core_type = #tpu.core_type<tc>, window_params = [{transform_indices = @transform_0, window_bounds = array<i64: 16, 128>}, {pipeline_mode = #tpu.pipeline_mode<synchronous>, transform_indices = @transform_1, window_bounds = array<i64: 128, 128>}, {pipeline_mode = #tpu.pipeline_mode<synchronous>, transform_indices = @transform_2, window_bounds = array<i64: 128, 128>}, {pipeline_mode = #tpu.pipeline_mode<synchronous>, transform_indices = @transform_3, window_bounds = array<i64: 8, 128>}, {transform_indices = @transform_4, window_bounds = array<i64: 16, 128>}]} {
    %c0 = arith.constant 0 : index
    %c0_0 = arith.constant 0 : index
    %0 = vector.load %arg1[%c0, %c0_0] : memref<16x128xf32, #tpu.memory_space<vmem>>, vector<16x128xf32>
    %c0_1 = arith.constant 0 : index
    %c0_2 = arith.constant 0 : index
    %1 = vector.load %arg2[%c0_1, %c0_2] : memref<128x128xf32, #tpu.memory_space<vmem>>, vector<128x128xf32>
    %cst = arith.constant dense<0.000000e+00> : vector<16x128xf32>
    %2 = tpu.matmul %0, %1, %cst {dimension_numbers = #tpu.dot_dimension_numbers<[1], [0], [0], [1], [0, 0, 1, 1], [], []>} : vector<16x128xf32>, vector<128x128xf32>, vector<16x128xf32> -> vector<16x128xf32>
    %c0_3 = arith.constant 0 : index
    %c0_4 = arith.constant 0 : index
    %3 = vector.load %arg4[%c0_3, %c0_4] : memref<8x128xf32, #tpu.memory_space<vmem>>, vector<8x128xf32>
    %4 = vector.extract_strided_slice %3 {offsets = [0, 0], sizes = [1, 128], strides = [1, 1]} : vector<8x128xf32> to vector<1x128xf32>
    %5 = vector.broadcast %4 : vector<1x128xf32> to vector<16x128xf32>
    %6 = arith.addf %2, %5 : vector<16x128xf32>
    %cst_5 = arith.constant 0.000000e+00 : f32
    %7 = vector.broadcast %cst_5 : f32 to vector<16x128xf32>
    %8 = arith.maximumf %6, %7 : vector<16x128xf32>
    %c0_6 = arith.constant 0 : index
    %c0_7 = arith.constant 0 : index
    %9 = vector.load %arg3[%c0_6, %c0_7] : memref<128x128xf32, #tpu.memory_space<vmem>>, vector<128x128xf32>
    %cst_8 = arith.constant dense<0.000000e+00> : vector<16x128xf32>
    %10 = tpu.matmul %8, %9, %cst_8 {dimension_numbers = #tpu.dot_dimension_numbers<[1], [0], [0], [1], [0, 0, 1, 1], [], []>} : vector<16x128xf32>, vector<128x128xf32>, vector<16x128xf32> -> vector<16x128xf32>
    %11 = vector.extract_strided_slice %3 {offsets = [1, 0], sizes = [1, 128], strides = [1, 1]} : vector<8x128xf32> to vector<1x128xf32>
    %12 = vector.broadcast %11 : vector<1x128xf32> to vector<16x128xf32>
    %13 = arith.addf %10, %12 : vector<16x128xf32>
    %c0_9 = arith.constant 0 : index
    %c0_10 = arith.constant 0 : index
    %14 = vector.load %arg5[%c0_9, %c0_10] : memref<16x128xf32, #tpu.memory_space<vmem>>, vector<16x128xf32>
    tpu.vector_store %arg5[%c0_9, %c0_10], %13 {strides = array<i32>} : memref<16x128xf32, #tpu.memory_space<vmem>>, vector<16x128xf32>,
    return
  }
  func.func @transform_0(%arg0: i32) -> (i32, i32) {
    %c0_i32 = arith.constant 0 : i32
    %c0_i32_0 = arith.constant 0 : i32
    return %arg0, %c0_i32 : i32, i32
  }
  func.func @transform_1(%arg0: i32) -> (i32, i32) {
    %c0_i32 = arith.constant 0 : i32
    %c0_i32_0 = arith.constant 0 : i32
    %c0_i32_1 = arith.constant 0 : i32
    return %c0_i32, %c0_i32_0 : i32, i32
  }
  func.func @transform_2(%arg0: i32) -> (i32, i32) {
    %c0_i32 = arith.constant 0 : i32
    %c0_i32_0 = arith.constant 0 : i32
    %c0_i32_1 = arith.constant 0 : i32
    return %c0_i32, %c0_i32_0 : i32, i32
  }
  func.func @transform_3(%arg0: i32) -> (i32, i32) {
    %c0_i32 = arith.constant 0 : i32
    %c0_i32_0 = arith.constant 0 : i32
    %c0_i32_1 = arith.constant 0 : i32
    return %c0_i32, %c0_i32_0 : i32, i32
  }
  func.func @transform_4(%arg0: i32) -> (i32, i32) {
    %c0_i32 = arith.constant 0 : i32
    %c0_i32_0 = arith.constant 0 : i32
    return %arg0, %c0_i32 : i32, i32
  }
}

</mosaic_0001>

<llo_original>
// kernel: tpu_custom_call.1
$region0: #{tpu_custom_call.1}
  #allocation0 [shape = 'u32[]', space=smem, size = 0x4, offset = 0x4, fixed_abs, tag = 'smem constant byte address 0x4 - core index']
  #allocation1 [shape = 'u32[144,128]{1,0:T(1,128)}', space=vmem, size = 0x12000, scoped, tag = 'internal scratch']
  %s0 = inlined_call_operand.hbm [shape: f32[16,128], index: 0, kind: input, shape index: {}]
  %s1 = inlined_call_operand.hbm [shape: f32[128,128], index: 1, kind: input, shape index: {}]
  %s2 = inlined_call_operand.hbm [shape: f32[128,128], index: 2, kind: input, shape index: {}]
  %s3 = inlined_call_operand.hbm [shape: f32[8,128], index: 3, kind: input, shape index: {}]
  %s4 = inlined_call_operand.hbm [shape: f32[16,128], index: 4, kind: output, shape index: {}]
  %s5 = sld [smem:[#allocation0]]
  $region42: #{tpu_custom_call.1} parent=0
    _
  %s7 = ssub.s32 1, %s5
  %s8 = scalar_select 0, %s7, %s5
  $region1: #{tpu_custom_call.1} parent=0
    #allocation2 [shape = 'u8[8192]{0}', space=vmem, size = 0x2000, scoped, tag = 'input window, operand 0, single buffered']
    #allocation3 [shape = 's32[1]{0}', space=sflag, size = 0x4, scoped, tag = 'scoped memory for tpu_custom_call.1']
    #allocation4 [shape = 's32[1]{0}', space=sflag, size = 0x4, scoped, tag = 'scoped memory for tpu_custom_call.1']
    #allocation5 [shape = 'u8[65536]{0}', space=vmem, size = 0x10000, scoped, tag = 'input window, operand 1, single buffered']
    #allocation6 [shape = 's32[1]{0}', space=sflag, size = 0x4, scoped, tag = 'scoped memory for tpu_custom_call.1']
    #allocation7 [shape = 'u8[65536]{0}', space=vmem, size = 0x10000, scoped, tag = 'input window, operand 2, single buffered']
    #allocation8 [shape = 'u8[4096]{0}', space=vmem, size = 0x1000, scoped, tag = 'input window, operand 3, single buffered']
    #allocation9 [shape = 's32[1]{0}', space=sflag, size = 0x4, scoped, tag = 'scoped memory for tpu_custom_call.1']
    #allocation10 [shape = 'u8[8192]{0}', space=vmem, size = 0x2000, scoped, tag = 'output window, operand 0, single buffered']
    %9 = vsyncpa [#allocation3], 0
    %10 = vsyncpa [#allocation6], 0
    %11 = vsyncpa [#allocation9], 0
    %12 = vsyncpa [#allocation4], 0
    // Predicated region
    $region2: #{tpu_custom_call.1} parent=1 // pred_check
      _
    $region3: #{tpu_custom_call.1} parent=1 // pred_check_branch
      %14 = sbr.rel (0) target = $region5
    $region4: #{tpu_custom_call.1} parent=1 // pred_region
      %s16 = ssub.s32 256, 256
      %17 = vsyncadd [#allocation3], %s16
      %s18 = sshll.u32 [#allocation2], 4
      %s19 = int_to_ptr.vmem [resolvable:$true] %s18
      %24 = dma.hbm_to_vmem [thread:$0]  %s0, 256, %s19, [#allocation3], 128, 128, 8
    $region5: #{tpu_custom_call.1} parent=1 // pred_fallthru
      _
    // Predicated region
    $region6: #{tpu_custom_call.1} parent=1 // pred_check
      _
    $region7: #{tpu_custom_call.1} parent=1 // pred_check_branch
      %26 = sbr.rel (0) target = $region9
    $region8: #{tpu_custom_call.1} parent=1 // pred_region
      %s28 = ssub.s32 2048, 2048
      %29 = vsyncadd [#allocation6], %s28
      %s30 = sshll.u32 [#allocation5], 4
      %s31 = int_to_ptr.vmem [resolvable:$true] %s30
      %36 = dma.hbm_to_vmem [thread:$0]  %s1, 2048, %s31, [#allocation6], 128, 128, 8
    $region9: #{tpu_custom_call.1} parent=1 // pred_fallthru
      _
    // Predicated region
    $region10: #{tpu_custom_call.1} parent=1 // pred_check
      _
    $region11: #{tpu_custom_call.1} parent=1 // pred_check_branch
      %38 = sbr.rel (0) target = $region13
    $region12: #{tpu_custom_call.1} parent=1 // pred_region
      %s40 = ssub.s32 2048, 2048
      %41 = vsyncadd [#allocation6], %s40
      %s42 = sshll.u32 [#allocation7], 4
      %s43 = int_to_ptr.vmem [resolvable:$true] %s42
      %48 = dma.hbm_to_vmem [thread:$0]  %s2, 2048, %s43, [#allocation6], 128, 128, 8
    $region13: #{tpu_custom_call.1} parent=1 // pred_fallthru
      _
    // Predicated region
    $region14: #{tpu_custom_call.1} parent=1 // pred_check
      _
    $region15: #{tpu_custom_call.1} parent=1 // pred_check_branch
      %50 = sbr.rel (0) target = $region17
    $region16: #{tpu_custom_call.1} parent=1 // pred_region
      %s52 = ssub.s32 128, 128
      %53 = vsyncadd [#allocation9], %s52
      %s55 = sshll.u32 [#allocation8], 4
      %s56 = int_to_ptr.vmem [resolvable:$true] %s55
      %58 = dma.hbm_to_vmem [thread:$0]  %s3, 128, %s56, [#allocation9]
    $region17: #{tpu_custom_call.1} parent=1 // pred_fallthru
      _
    // Predicated region
    $region18: #{tpu_custom_call.1} parent=1 // pred_check
      _
    $region19: #{tpu_custom_call.1} parent=1 // pred_check_branch
      %60 = sbr.rel (0) target = $region21
    $region20: #{tpu_custom_call.1} parent=1 // pred_region
      %61 = dma.done [#allocation3], 256
    $region21: #{tpu_custom_call.1} parent=1 // pred_fallthru
      _
    // Predicated region
    $region22: #{tpu_custom_call.1} parent=1 // pred_check
      _
    $region23: #{tpu_custom_call.1} parent=1 // pred_check_branch
      %63 = sbr.rel (0) target = $region25
    $region24: #{tpu_custom_call.1} parent=1 // pred_region
      %64 = dma.done [#allocation6], 2048
    $region25: #{tpu_custom_call.1} parent=1 // pred_fallthru
      _
    // Predicated region
    $region26: #{tpu_custom_call.1} parent=1 // pred_check
      _
    $region27: #{tpu_custom_call.1} parent=1 // pred_check_branch
      %66 = sbr.rel (0) target = $region29
    $region28: #{tpu_custom_call.1} parent=1 // pred_region
      %67 = dma.done [#allocation6], 2048
    $region29: #{tpu_custom_call.1} parent=1 // pred_fallthru
      _
    // Predicated region
    $region30: #{tpu_custom_call.1} parent=1 // pred_check
      _
    $region31: #{tpu_custom_call.1} parent=1 // pred_check_branch
      %69 = sbr.rel (0) target = $region33
    $region32: #{tpu_custom_call.1} parent=1 // pred_region
      %70 = dma.done [#allocation9], 128
    $region33: #{tpu_custom_call.1} parent=1 // pred_fallthru
      _
    %v71 = vld [vmem:[#allocation2] sm:$0xff]
    %v72 = vld [vmem:[#allocation2 + $0x8] sm:$0xff]
    %v73 = vld [vmem:[#allocation5] sm:$0xff]
    %v74 = vld [vmem:[#allocation5 + $0x8] sm:$0xff]
    %v75 = vld [vmem:[#allocation5 + $0x10] sm:$0xff]
    %v76 = vld [vmem:[#allocation5 + $0x18] sm:$0xff]
    %v77 = vld [vmem:[#allocation5 + $0x20] sm:$0xff]
    %v78 = vld [vmem:[#allocation5 + $0x28] sm:$0xff]
    %v79 = vld [vmem:[#allocation5 + $0x30] sm:$0xff]
    %v80 = vld [vmem:[#allocation5 + $0x38] sm:$0xff]
    %v81 = vld [vmem:[#allocation5 + $0x40] sm:$0xff]
    %v82 = vld [vmem:[#allocation5 + $0x48] sm:$0xff]
    %v83 = vld [vmem:[#allocation5 + $0x50] sm:$0xff]
    %v84 = vld [vmem:[#allocation5 + $0x58] sm:$0xff]
    %v85 = vld [vmem:[#allocation5 + $0x60] sm:$0xff]
    %v86 = vld [vmem:[#allocation5 + $0x68] sm:$0xff]
    %v87 = vld [vmem:[#allocation5 + $0x70] sm:$0xff]
    %v88 = vld [vmem:[#allocation5 + $0x78] sm:$0xff]
    %v89 = vld [vmem:[#allocation8] sm:$0xff]
    %v90 = vlaneseq
    %v91 = vshrl.u32 %v90, 7
    %v92 = vsub.s32 0, %v91
    %v93 = vrot.slane %v89, %v92
    %94 = vmatprep.subr.mxu0 0.0
    %95 = vmatpush1.msra.mxu0 %v88
    %96 = vmatprep.subr.mxu0 0.0
    %97 = vmatpush1.msra.mxu0 %v87
    %98 = vmatprep.subr.mxu0 0.0
    %99 = vmatpush1.msra.mxu0 %v86
    %100 = vmatprep.subr.mxu0 0.0
    %101 = vmatpush1.msra.mxu0 %v85
    %102 = vmatprep.subr.mxu0 0.0
    %103 = vmatpush1.msra.mxu0 %v84
    %104 = vmatprep.subr.mxu0 0.0
    %105 = vmatpush1.msra.mxu0 %v83
    %106 = vmatprep.subr.mxu0 0.0
    %107 = vmatpush1.msra.mxu0 %v82
    %108 = vmatprep.subr.mxu0 0.0
    %109 = vmatpush1.msra.mxu0 %v81
    %110 = vmatprep.subr.mxu0 0.0
    %111 = vmatpush1.msra.mxu0 %v80
    %112 = vmatprep.subr.mxu0 0.0
    %113 = vmatpush1.msra.mxu0 %v79
    %114 = vmatprep.subr.mxu0 0.0
    %115 = vmatpush1.msra.mxu0 %v78
    %116 = vmatprep.subr.mxu0 0.0
    %117 = vmatpush1.msra.mxu0 %v77
    %118 = vmatprep.subr.mxu0 0.0
    %119 = vmatpush1.msra.mxu0 %v76
    %120 = vmatprep.subr.mxu0 0.0
    %121 = vmatpush1.msra.mxu0 %v75
    %122 = vmatprep.subr.mxu0 0.0
    %123 = vmatpush1.msra.mxu0 %v74
    %124 = vmatprep.subr.mxu0 0.0
    %125 = vmatpush1.msra.mxu0 %v73
    %126 = vmatprep.subr.mxu0 0.0
    %127 = vmatpush2.msra.mxu0 0.0
    %128 = vmatprep.subr.mxu0 0.0
    %129 = vmatpush2.msra.mxu0 0.0
    %130 = vmatprep.subr.mxu0 0.0
    %131 = vmatpush2.msra.mxu0 0.0
    %132 = vmatprep.subr.mxu0 0.0
    %133 = vmatpush2.msra.mxu0 0.0
    %134 = vmatprep.subr.mxu0 0.0
    %135 = vmatpush2.msra.mxu0 0.0
    %136 = vmatprep.subr.mxu0 0.0
    %137 = vmatpush2.msra.mxu0 0.0
    %138 = vmatprep.subr.mxu0 0.0
    %139 = vmatpush2.msra.mxu0 0.0
    %140 = vmatprep.subr.mxu0 0.0
    %141 = vmatpush2.msra.mxu0 0.0
    %142 = vmatprep.subr.mxu0 0.0
    %143 = vmatpush2.msra.mxu0 0.0
    %144 = vmatprep.subr.mxu0 0.0
    %145 = vmatpush2.msra.mxu0 0.0
    %146 = vmatprep.subr.mxu0 0.0
    %147 = vmatpush2.msra.mxu0 0.0
    %148 = vmatprep.subr.mxu0 0.0
    %149 = vmatpush2.msra.mxu0 0.0
    %150 = vmatprep.subr.mxu0 0.0
    %151 = vmatpush2.msra.mxu0 0.0
    %152 = vmatprep.subr.mxu0 0.0
    %153 = vmatpush2.msra.mxu0 0.0
    %154 = vmatprep.subr.mxu0 0.0
    %155 = vmatpush2.msra.mxu0 0.0
    %156 = vmatprep.subr.mxu0 0.0
    %157 = vmatpush2.msra.mxu0 0.0
    %158 = vmatprep.mubr.f32.mxu0 0.0
    %159 = vmatmul.mubr.f32.gmra.mxu0 %v71
    %v160 = vpop.f32.mrf.mxu0
    %v161 = vadd.f32 %v93, %v160
    %v162 = vpop.f32.mrf.mxu0
    %163 = vmatprep.mubr.f32.mxu0 0.0
    %164 = vmatmul.mubr.f32.gmra.mxu0 %v72
    %v165 = vpop.f32.mrf.mxu0
    %v166 = vadd.f32 %v93, %v165
    %v167 = vpop.f32.mrf.mxu0
    %168 = vdwg.mxu0
    %v169 = vmax.f32 %v161, 0.0
    %v170 = vmax.f32 %v166, 0.0
    %v171 = vld [vmem:[#allocation7] sm:$0xff]
    %v172 = vld [vmem:[#allocation7 + $0x8] sm:$0xff]
    %v173 = vld [vmem:[#allocation7 + $0x10] sm:$0xff]
    %v174 = vld [vmem:[#allocation7 + $0x18] sm:$0xff]
    %v175 = vld [vmem:[#allocation7 + $0x20] sm:$0xff]
    %v176 = vld [vmem:[#allocation7 + $0x28] sm:$0xff]
    %v177 = vld [vmem:[#allocation7 + $0x30] sm:$0xff]
    %v178 = vld [vmem:[#allocation7 + $0x38] sm:$0xff]
    %v179 = vld [vmem:[#allocation7 + $0x40] sm:$0xff]
    %v180 = vld [vmem:[#allocation7 + $0x48] sm:$0xff]
    %v181 = vld [vmem:[#allocation7 + $0x50] sm:$0xff]
    %v182 = vld [vmem:[#allocation7 + $0x58] sm:$0xff]
    %v183 = vld [vmem:[#allocation7 + $0x60] sm:$0xff]
    %v184 = vld [vmem:[#allocation7 + $0x68] sm:$0xff]
    %v185 = vld [vmem:[#allocation7 + $0x70] sm:$0xff]
    %v186 = vld [vmem:[#allocation7 + $0x78] sm:$0xff]
    %v187 = vlaneseq
    %v188 = vshrl.u32 %v187, 7
    %v189 = vsub.s32 1, %v188
    %v190 = vrot.slane %v89, %v189
    %191 = vmatprep.subr.mxu0 0.0
    %192 = vmatpush1.msra.mxu0 %v186
    %193 = vmatprep.subr.mxu0 0.0
    %194 = vmatpush1.msra.mxu0 %v185
    %195 = vmatprep.subr.mxu0 0.0
    %196 = vmatpush1.msra.mxu0 %v184
    %197 = vmatprep.subr.mxu0 0.0
    %198 = vmatpush1.msra.mxu0 %v183
    %199 = vmatprep.subr.mxu0 0.0
    %200 = vmatpush1.msra.mxu0 %v182
    %201 = vmatprep.subr.mxu0 0.0
    %202 = vmatpush1.msra.mxu0 %v181
    %203 = vmatprep.subr.mxu0 0.0
    %204 = vmatpush1.msra.mxu0 %v180
    %205 = vmatprep.subr.mxu0 0.0
    %206 = vmatpush1.msra.mxu0 %v179
    %207 = vmatprep.subr.mxu0 0.0
    %208 = vmatpush1.msra.mxu0 %v178
    %209 = vmatprep.subr.mxu0 0.0
    %210 = vmatpush1.msra.mxu0 %v177
    %211 = vmatprep.subr.mxu0 0.0
    %212 = vmatpush1.msra.mxu0 %v176
    %213 = vmatprep.subr.mxu0 0.0
    %214 = vmatpush1.msra.mxu0 %v175
    %215 = vmatprep.subr.mxu0 0.0
    %216 = vmatpush1.msra.mxu0 %v174
    %217 = vmatprep.subr.mxu0 0.0
    %218 = vmatpush1.msra.mxu0 %v173
    %219 = vmatprep.subr.mxu0 0.0
    %220 = vmatpush1.msra.mxu0 %v172
    %221 = vmatprep.subr.mxu0 0.0
    %222 = vmatpush1.msra.mxu0 %v171
    %223 = vmatprep.subr.mxu0 0.0
    %224 = vmatpush2.msra.mxu0 0.0
    %225 = vmatprep.subr.mxu0 0.0
    %226 = vmatpush2.msra.mxu0 0.0
    %227 = vmatprep.subr.mxu0 0.0
    %228 = vmatpush2.msra.mxu0 0.0
    %229 = vmatprep.subr.mxu0 0.0
    %230 = vmatpush2.msra.mxu0 0.0
    %231 = vmatprep.subr.mxu0 0.0
    %232 = vmatpush2.msra.mxu0 0.0
    %233 = vmatprep.subr.mxu0 0.0
    %234 = vmatpush2.msra.mxu0 0.0
    %235 = vmatprep.subr.mxu0 0.0
    %236 = vmatpush2.msra.mxu0 0.0
    %237 = vmatprep.subr.mxu0 0.0
    %238 = vmatpush2.msra.mxu0 0.0
    %239 = vmatprep.subr.mxu0 0.0
    %240 = vmatpush2.msra.mxu0 0.0
    %241 = vmatprep.subr.mxu0 0.0
    %242 = vmatpush2.msra.mxu0 0.0
    %243 = vmatprep.subr.mxu0 0.0
    %244 = vmatpush2.msra.mxu0 0.0
    %245 = vmatprep.subr.mxu0 0.0
    %246 = vmatpush2.msra.mxu0 0.0
    %247 = vmatprep.subr.mxu0 0.0
    %248 = vmatpush2.msra.mxu0 0.0
    %249 = vmatprep.subr.mxu0 0.0
    %250 = vmatpush2.msra.mxu0 0.0
    %251 = vmatprep.subr.mxu0 0.0
    %252 = vmatpush2.msra.mxu0 0.0
    %253 = vmatprep.subr.mxu0 0.0
    %254 = vmatpush2.msra.mxu0 0.0
    %255 = vmatprep.mubr.f32.mxu0 0.0
    %256 = vmatmul.mubr.f32.gmra.mxu0 %v169
    %v257 = vpop.f32.mrf.mxu0
    %v258 = vadd.f32 %v190, %v257
    %v259 = vpop.f32.mrf.mxu0
    %260 = vmatprep.mubr.f32.mxu0 0.0
    %261 = vmatmul.mubr.f32.gmra.mxu0 %v170
    %v262 = vpop.f32.mrf.mxu0
    %v263 = vadd.f32 %v190, %v262
    %v264 = vpop.f32.mrf.mxu0
    %265 = vdwg.mxu0
    %266 = vst [vmem:[#allocation10] sm:$0xff] %v258
    %267 = vst [vmem:[#allocation10 + $0x8] sm:$0xff] %v263
    // Predicated region
    $region34: #{tpu_custom_call.1} parent=1 // pred_check
      _
    $region35: #{tpu_custom_call.1} parent=1 // pred_check_branch
      %269 = sbr.rel (0) target = $region37
    $region36: #{tpu_custom_call.1} parent=1 // pred_region
      %s271 = ssub.s32 256, 256
      %272 = vsyncadd [#allocation4], %s271
      %s273 = sshll.u32 [#allocation10], 4
      %s274 = int_to_ptr.vmem [resolvable:$true] %s273
      %279 = dma.vmem_to_hbm [thread:$0]  %s274, 256, %s4, [#allocation4], 128, 128, 8
    $region37: #{tpu_custom_call.1} parent=1 // pred_fallthru
      _
    // Predicated region
    $region38: #{tpu_custom_call.1} parent=1 // pred_check
      _
    $region39: #{tpu_custom_call.1} parent=1 // pred_check_branch
      %281 = sbr.rel (0) target = $region41
    $region40: #{tpu_custom_call.1} parent=1 // pred_region
      %282 = dma.done [#allocation4], 256
    $region41: #{tpu_custom_call.1} parent=1 // pred_fallthru
      _
    %283 = vsyncpa [#allocation3], 1
    %284 = vsyncpa [#allocation6], 1
    %285 = vsyncpa [#allocation9], 1
    %286 = vsyncpa [#allocation4], 1

</llo_original>
